<compile_context>
chip_gen: v6e
topology: v6e:2x2x1
jax: 0.10.0
libtpu: 0.0.40
codegen_flags: <defaults>
</compile_context>

<pallas_src>
import functools
import math

import jax
import jax.numpy as jnp
from jax.experimental import pallas as pl
from jax.experimental.pallas import tpu as pltpu

INPUT_SIZE = 2
LAYER1_SIZE = 32
LAYER2_SIZE = 16
OUTPUT_SIZE = 1


def _round_up(n, m):
    return ((n + m - 1) // m) * m


def _mlp_kernel(x_ref, w1_ref, b1_ref, w2_ref, b2_ref, w3t_ref, b3_ref, o_ref,
                *, l1_on_mxu):
    # Feature-major tiles: the batch sits on the 128-lane axis everywhere.
    x = x_ref[...]                                    # (2, Bt)

    if l1_on_mxu:
        # v5e-leaning option: K=2 matmul on the (otherwise idle) MXU.
        h1 = jnp.dot(w1_ref[...], x, preferred_element_type=jnp.float32)
    else:
        # Default: two broadcast FMAs on the VPU; (32,1)*(1,Bt) -> (32,Bt).
        w1 = w1_ref[...]                              # (32, 2)
        h1 = w1[:, 0:1] * x[0:1, :] + w1[:, 1:2] * x[1:2, :]
    h1 = jnp.maximum(h1 + b1_ref[...], 0.0)           # (32, Bt)

    # Layer 2: (16,32) @ (32,Bt) on the MXU, f32 accumulation.
    h2 = jnp.dot(w2_ref[...], h1,
                 preferred_element_type=jnp.float32) + b2_ref[...]
    h2 = jnp.maximum(h2, 0.0)                         # (16, Bt)

    # Layer 3 (out_features=1): VPU multiply + cross-sublane (XLU) reduce.
    out = jnp.sum(w3t_ref[...] * h2, axis=0, keepdims=True) + b3_ref[0]
    o_ref[...] = out.astype(o_ref.dtype)              # (1, Bt)


@functools.partial(jax.jit, static_argnames=("batch_tile", "l1_on_mxu"))
def ai_forward_t(xt, params, *, batch_tile=4096, l1_on_mxu=False):
    """Feature-major fast path.  xt: (2, B).  Returns (1, B) float32."""
    assert batch_tile % 128 == 0, "batch_tile must be a multiple of 128 lanes"
    assert xt.shape[0] == INPUT_SIZE
    w1, b1, w2, b2, w3t, b3 = params
    B = xt.shape[1]

    # Lane-pad only (<=127 dead columns); the grid itself may be ragged.
    B_lane = _round_up(B, 128)
    if B_lane != B:
        xt = jnp.pad(xt, ((0, 0), (0, B_lane - B)))

    # Tile: multiple of 128, capped by batch_tile, and small enough that large
    # batches produce >=4 grid steps (so "parallel" shards across v7x's 2 TCs).
    tile = max(128, min(batch_tile, _round_up(pl.cdiv(B_lane, 4), 128)))
    grid = (pl.cdiv(B_lane, tile),)

    # Weights/biases: full-array blocks with constant index maps => resident
    # in VMEM for the whole grid (single DMA).  Scalar output bias -> SMEM.
    full = lambda a: pl.BlockSpec(a.shape, lambda i: (0, 0))
    b3_smem = jnp.reshape(b3, (1,))

    flops = 2 * B_lane * (INPUT_SIZE * LAYER1_SIZE
                          + LAYER1_SIZE * LAYER2_SIZE
                          + LAYER2_SIZE * OUTPUT_SIZE)
    bytes_accessed = 4 * B_lane * (INPUT_SIZE + OUTPUT_SIZE) + 4 * (
        w1.size + b1.size + w2.size + b2.size + w3t.size + 1)

    out_t = pl.pallas_call(
        functools.partial(_mlp_kernel, l1_on_mxu=l1_on_mxu),
        out_shape=jax.ShapeDtypeStruct((OUTPUT_SIZE, B_lane), jnp.float32),
        grid_spec=pltpu.PrefetchScalarGridSpec(
            num_scalar_prefetch=0,
            grid=grid,
            in_specs=[
                pl.BlockSpec((INPUT_SIZE, tile), lambda i: (0, i)),
                full(w1), full(b1), full(w2), full(b2), full(w3t),
                pl.BlockSpec(memory_space=pltpu.MemorySpace.SMEM),
            ],
            out_specs=pl.BlockSpec((OUTPUT_SIZE, tile), lambda i: (0, i)),
        ),
        compiler_params=pltpu.CompilerParams(
            dimension_semantics=("parallel",),
            vmem_limit_bytes=48 * 1024 * 1024),
        cost_estimate=pl.CostEstimate(flops=int(flops), transcendentals=0,
                                      bytes_accessed=int(bytes_accessed)),
    )(xt, w1, b1, w2, b2, w3t, b3_smem)

    return out_t[:, :B]                               # (1, B)


@functools.partial(jax.jit, static_argnames=("batch_tile", "l1_on_mxu"))
def ai_forward(x, params, *, batch_tile=4096, l1_on_mxu=False):
    """PyTorch-layout convenience wrapper.  x: (B, 2).  Returns (B, 1).

    Pays exactly one XLA relayout (the transpose); producers that can supply
    feature-major activations should call ai_forward_t directly.
    """
    B = x.shape[0]
    out_t = ai_forward_t(jnp.transpose(x), params,
                         batch_tile=batch_tile, l1_on_mxu=l1_on_mxu)
    # (1, B) -> (B, 1) is a pure row-major reshape: no data movement.
    return jnp.reshape(out_t, (B, OUTPUT_SIZE))


def init_params(key):
    """Deterministic init mirroring nn.Linear's default U(-1/sqrt(fan_in), +).

    Weights are stored (out_features, in_features) like PyTorch; biases as
    (out_features, 1) columns so they broadcast over the batch-lane axis.
    The last-layer weight is stored transposed (16, 1) for the in-kernel
    VPU/XLU reduce.
    """
    def linear(key, fan_in, fan_out):
        kw, kb = jax.random.split(key)
        bound = 1.0 / math.sqrt(fan_in)
        w = jax.random.uniform(kw, (fan_out, fan_in), jnp.float32, -bound, bound)
        b = jax.random.uniform(kb, (fan_out, 1), jnp.float32, -bound, bound)
        return w, b

    k1, k2, k3 = jax.random.split(key, 3)
    w1, b1 = linear(k1, INPUT_SIZE, LAYER1_SIZE)
    w2, b2 = linear(k2, LAYER1_SIZE, LAYER2_SIZE)
    w3, b3 = linear(k3, LAYER2_SIZE, OUTPUT_SIZE)
    return (w1, b1, w2, b2, jnp.transpose(w3), b3)


def _reference(x, params):
    w1, b1, w2, b2, w3t, b3 = params
    h1 = jnp.maximum(x @ w1.T + b1.T, 0.0)
    h2 = jnp.maximum(h1 @ w2.T + b2.T, 0.0)
    return h2 @ w3t + b3.T


if __name__ == "__main__":
    key = jax.random.PRNGKey(0)
    kp, kx1, kx2, kx3, kx4 = jax.random.split(key, 5)
    params = init_params(kp)

    # Small deterministic check (lane-padding path, single 128-wide tile).
    x_small = jax.random.normal(kx1, (8, INPUT_SIZE), jnp.float32)
    out_small = ai_forward(x_small, params)
    jax.block_until_ready(out_small)
    ref_small = _reference(x_small, params)
    assert out_small.shape == (8, OUTPUT_SIZE)
    assert jnp.allclose(out_small, ref_small, atol=1e-5, rtol=1e-4)

    # Layer-1-on-MXU variant (v5e-leaning option).
    out_mxu = ai_forward(x_small, params, l1_on_mxu=True)
    jax.block_until_ready(out_mxu)
    assert jnp.allclose(out_mxu, ref_small, atol=1e-5, rtol=1e-4)

    # Multi-tile check: B=2048 -> tile=512, grid=(4,)  (exercises the
    # "parallel" axis; both TensorCores on v7x).
    x_mid = jax.random.normal(kx2, (2048, INPUT_SIZE), jnp.float32)
    out_mid = ai_forward(x_mid, params)
    jax.block_until_ready(out_mid)
    assert out_mid.shape == (2048, OUTPUT_SIZE)
    assert jnp.allclose(out_mid, _reference(x_mid, params), atol=1e-5, rtol=1e-4)

    # Ragged-grid check: B=600 -> lane-pad to 640, tile=256, grid=(3,) with a
    # partial (masked) edge block.
    x_rag = jax.random.normal(kx3, (600, INPUT_SIZE), jnp.float32)
    out_rag = ai_forward(x_rag, params)
    jax.block_until_ready(out_rag)
    assert out_rag.shape == (600, OUTPUT_SIZE)
    assert jnp.allclose(out_rag, _reference(x_rag, params), atol=1e-5, rtol=1e-4)

    # Feature-major fast path: no wrapper relayout at all.
    xt = jax.random.normal(kx4, (INPUT_SIZE, 256), jnp.float32)
    out_t = ai_forward_t(xt, params)
    jax.block_until_ready(out_t)
    assert out_t.shape == (OUTPUT_SIZE, 256)
    assert jnp.allclose(out_t, _reference(xt.T, params).T, atol=1e-5, rtol=1e-4)

    print("KERNEL_OK")
</pallas_src>

<mosaic_0001>
module attributes {stable_mosaic.version = 11 : i64} {
  func.func @_mlp_kernel(%arg0: i32, %arg1: memref<2x128xf32, #tpu.memory_space<vmem>>, %arg2: memref<32x2xf32, #tpu.memory_space<vmem>>, %arg3: memref<32x1xf32, #tpu.memory_space<vmem>>, %arg4: memref<16x32xf32, #tpu.memory_space<vmem>>, %arg5: memref<16x1xf32, #tpu.memory_space<vmem>>, %arg6: memref<16x1xf32, #tpu.memory_space<vmem>>, %arg7: memref<1xf32, #tpu.memory_space<smem>>, %arg8: memref<1x128xf32, #tpu.memory_space<vmem>>) attributes {dimension_semantics = [#tpu.dimension_semantics<parallel>], iteration_bounds = array<i64: 1>, scalar_prefetch = 0 : i64, scratch_operands = 0 : i64, tpu.core_type = #tpu.core_type<tc>, window_params = [{transform_indices = @transform_0, window_bounds = array<i64: 2, 128>}, {pipeline_mode = #tpu.pipeline_mode<synchronous>, transform_indices = @transform_1, window_bounds = array<i64: 32, 2>}, {pipeline_mode = #tpu.pipeline_mode<synchronous>, transform_indices = @transform_2, window_bounds = array<i64: 32, 1>}, {pipeline_mode = #tpu.pipeline_mode<synchronous>, transform_indices = @transform_3, window_bounds = array<i64: 16, 32>}, {pipeline_mode = #tpu.pipeline_mode<synchronous>, transform_indices = @transform_4, window_bounds = array<i64: 16, 1>}, {pipeline_mode = #tpu.pipeline_mode<synchronous>, transform_indices = @transform_5, window_bounds = array<i64: 16, 1>}, {transform_indices = @transform_6, window_bounds = array<i64: 1>}, {transform_indices = @transform_7, window_bounds = array<i64: 1, 128>}]} {
    %c0 = arith.constant 0 : index
    %c0_0 = arith.constant 0 : index
    %0 = vector.load %arg1[%c0, %c0_0] : memref<2x128xf32, #tpu.memory_space<vmem>>, vector<2x128xf32>
    %c0_1 = arith.constant 0 : index
    %c0_2 = arith.constant 0 : index
    %1 = vector.load %arg2[%c0_1, %c0_2] : memref<32x2xf32, #tpu.memory_space<vmem>>, vector<32x2xf32>
    %2 = vector.extract_strided_slice %1 {offsets = [0, 0], sizes = [32, 1], strides = [1, 1]} : vector<32x2xf32> to vector<32x1xf32>
    %3 = vector.extract_strided_slice %0 {offsets = [0, 0], sizes = [1, 128], strides = [1, 1]} : vector<2x128xf32> to vector<1x128xf32>
    %4 = vector.broadcast %2 : vector<32x1xf32> to vector<32x128xf32>
    %5 = vector.broadcast %3 : vector<1x128xf32> to vector<32x128xf32>
    %6 = arith.mulf %4, %5 : vector<32x128xf32>
    %7 = vector.extract_strided_slice %1 {offsets = [0, 1], sizes = [32, 1], strides = [1, 1]} : vector<32x2xf32> to vector<32x1xf32>
    %8 = vector.extract_strided_slice %0 {offsets = [1, 0], sizes = [1, 128], strides = [1, 1]} : vector<2x128xf32> to vector<1x128xf32>
    %9 = vector.broadcast %7 : vector<32x1xf32> to vector<32x128xf32>
    %10 = vector.broadcast %8 : vector<1x128xf32> to vector<32x128xf32>
    %11 = arith.mulf %9, %10 : vector<32x128xf32>
    %12 = arith.addf %6, %11 : vector<32x128xf32>
    %c0_3 = arith.constant 0 : index
    %c0_4 = arith.constant 0 : index
    %13 = vector.load %arg3[%c0_3, %c0_4] : memref<32x1xf32, #tpu.memory_space<vmem>>, vector<32x1xf32>
    %14 = vector.broadcast %13 : vector<32x1xf32> to vector<32x128xf32>
    %15 = arith.addf %12, %14 : vector<32x128xf32>
    %cst = arith.constant 0.000000e+00 : f32
    %16 = vector.broadcast %cst : f32 to vector<32x128xf32>
    %17 = arith.maximumf %15, %16 : vector<32x128xf32>
    %c0_5 = arith.constant 0 : index
    %c0_6 = arith.constant 0 : index
    %18 = vector.load %arg4[%c0_5, %c0_6] : memref<16x32xf32, #tpu.memory_space<vmem>>, vector<16x32xf32>
    %cst_7 = arith.constant dense<0.000000e+00> : vector<16x128xf32>
    %19 = tpu.matmul %18, %17, %cst_7 {dimension_numbers = #tpu.dot_dimension_numbers<[1], [0], [0], [1], [0, 0, 1, 1], [], []>} : vector<16x32xf32>, vector<32x128xf32>, vector<16x128xf32> -> vector<16x128xf32>
    %c0_8 = arith.constant 0 : index
    %c0_9 = arith.constant 0 : index
    %20 = vector.load %arg5[%c0_8, %c0_9] : memref<16x1xf32, #tpu.memory_space<vmem>>, vector<16x1xf32>
    %21 = vector.broadcast %20 : vector<16x1xf32> to vector<16x128xf32>
    %22 = arith.addf %19, %21 : vector<16x128xf32>
    %cst_10 = arith.constant 0.000000e+00 : f32
    %23 = vector.broadcast %cst_10 : f32 to vector<16x128xf32>
    %24 = arith.maximumf %22, %23 : vector<16x128xf32>
    %c0_11 = arith.constant 0 : index
    %c0_12 = arith.constant 0 : index
    %25 = vector.load %arg6[%c0_11, %c0_12] : memref<16x1xf32, #tpu.memory_space<vmem>>, vector<16x1xf32>
    %26 = vector.broadcast %25 : vector<16x1xf32> to vector<16x128xf32>
    %27 = arith.mulf %26, %24 : vector<16x128xf32>
    %cst_13 = arith.constant dense<0.000000e+00> : vector<128xf32>
    %28 = vector.multi_reduction <add>, %27, %cst_13 [0] : vector<16x128xf32> to vector<128xf32>
    %29 = vector.shape_cast %28 : vector<128xf32> to vector<1x128xf32>
    %c0_14 = arith.constant 0 : index
    %30 = memref.load %arg7[%c0_14] : memref<1xf32, #tpu.memory_space<smem>>
    %31 = vector.broadcast %30 : f32 to vector<1x128xf32>
    %32 = arith.addf %29, %31 : vector<1x128xf32>
    %c0_15 = arith.constant 0 : index
    %c0_16 = arith.constant 0 : index
    %33 = vector.load %arg8[%c0_15, %c0_16] : memref<1x128xf32, #tpu.memory_space<vmem>>, vector<1x128xf32>
    tpu.vector_store %arg8[%c0_15, %c0_16], %32 {strides = array<i32>} : memref<1x128xf32, #tpu.memory_space<vmem>>, vector<1x128xf32>,
    return
  }
  func.func @transform_0(%arg0: i32) -> (i32, i32) {
    %c0_i32 = arith.constant 0 : i32
    %c0_i32_0 = arith.constant 0 : i32
    return %c0_i32, %arg0 : i32, i32
  }
  func.func @transform_1(%arg0: i32) -> (i32, i32) {
    %c0_i32 = arith.constant 0 : i32
    %c0_i32_0 = arith.constant 0 : i32
    %c0_i32_1 = arith.constant 0 : i32
    return %c0_i32, %c0_i32_0 : i32, i32
  }
  func.func @transform_2(%arg0: i32) -> (i32, i32) {
    %c0_i32 = arith.constant 0 : i32
    %c0_i32_0 = arith.constant 0 : i32
    %c0_i32_1 = arith.constant 0 : i32
    return %c0_i32, %c0_i32_0 : i32, i32
  }
  func.func @transform_3(%arg0: i32) -> (i32, i32) {
    %c0_i32 = arith.constant 0 : i32
    %c0_i32_0 = arith.constant 0 : i32
    %c0_i32_1 = arith.constant 0 : i32
    return %c0_i32, %c0_i32_0 : i32, i32
  }
  func.func @transform_4(%arg0: i32) -> (i32, i32) {
    %c0_i32 = arith.constant 0 : i32
    %c0_i32_0 = arith.constant 0 : i32
    %c0_i32_1 = arith.constant 0 : i32
    return %c0_i32, %c0_i32_0 : i32, i32
  }
  func.func @transform_5(%arg0: i32) -> (i32, i32) {
    %c0_i32 = arith.constant 0 : i32
    %c0_i32_0 = arith.constant 0 : i32
    %c0_i32_1 = arith.constant 0 : i32
    return %c0_i32, %c0_i32_0 : i32, i32
  }
  func.func @transform_6(%arg0: i32) -> i32 {
    %c0_i32 = arith.constant 0 : i32
    %c0_i32_0 = arith.constant 0 : i32
    return %c0_i32 : i32
  }
  func.func @transform_7(%arg0: i32) -> (i32, i32) {
    %c0_i32 = arith.constant 0 : i32
    %c0_i32_0 = arith.constant 0 : i32
    return %c0_i32, %arg0 : i32, i32
  }
}

</mosaic_0001>

<llo_original>
// kernel: ai_forward_t.1
$region0: #{ai_forward_t.1}
  #allocation0 [shape = 'u32[]', space=smem, size = 0x4, offset = 0x4, fixed_abs, tag = 'smem constant byte address 0x4 - core index']
  #allocation1 [shape = 'u32[144,128]{1,0:T(1,128)}', space=vmem, size = 0x12000, scoped, tag = 'internal scratch']
  #allocation2 [shape = 'f32[1]{0:T(128)S(6)}', space=smem, size = 0x200, scoped, tag = 'scoped memory for ai_forward_t.1']
  %s0 = inlined_call_operand.vmem [shape: f32[2,128], index: 0, kind: input, shape index: {}]
  %s1 = inlined_call_operand.vmem [shape: f32[32,2], index: 1, kind: input, shape index: {}]
  %s2 = inlined_call_operand.vmem [shape: f32[32,1], index: 2, kind: input, shape index: {}]
  %s3 = inlined_call_operand.vmem [shape: f32[16,32], index: 3, kind: input, shape index: {}]
  %s4 = inlined_call_operand.vmem [shape: f32[16,1], index: 4, kind: input, shape index: {}]
  %s5 = inlined_call_operand.vmem [shape: f32[16,1], index: 5, kind: input, shape index: {}]
  %s6 = inlined_call_operand.<no memory space> [shape: f32[1], index: 6, kind: input, shape index: {}]
  %s7 = inlined_call_operand.hbm [shape: f32[1,128], index: 7, kind: output, shape index: {}]
  %s8 = sld [smem:[#allocation0]]
  $region38: #{ai_forward_t.1} parent=0
    _
  %s10 = ssub.s32 1, %s8
  %s11 = scalar_select 0, %s10, %s8
  %12 = sst [smem:[#allocation2]] %s6
  $region1: #{ai_forward_t.1} parent=0
    #allocation3 [shape = 'u8[512]{0}', space=vmem, size = 0x400, scoped, tag = 'output window, operand 0, single buffered']
    #allocation4 [shape = 's32[1]{0}', space=sflag, size = 0x4, scoped, tag = 'scoped memory for ai_forward_t.1']
    %13 = vsyncpa [#allocation4], 0
    // Predicated region
    $region2: #{ai_forward_t.1} parent=1 // pred_check
      _
    $region3: #{ai_forward_t.1} parent=1 // pred_check_branch
      %15 = sbr.rel (0) target = $region5
    $region4: #{ai_forward_t.1} parent=1 // pred_region
      _
    $region5: #{ai_forward_t.1} parent=1 // pred_fallthru
      _
    // Predicated region
    $region6: #{ai_forward_t.1} parent=1 // pred_check
      _
    $region7: #{ai_forward_t.1} parent=1 // pred_check_branch
      %17 = sbr.rel (0) target = $region9
    $region8: #{ai_forward_t.1} parent=1 // pred_region
      _
    $region9: #{ai_forward_t.1} parent=1 // pred_fallthru
      _
    // Predicated region
    $region10: #{ai_forward_t.1} parent=1 // pred_check
      _
    $region11: #{ai_forward_t.1} parent=1 // pred_check_branch
      %19 = sbr.rel (0) target = $region13
    $region12: #{ai_forward_t.1} parent=1 // pred_region
      _
    $region13: #{ai_forward_t.1} parent=1 // pred_fallthru
      _
    // Predicated region
    $region14: #{ai_forward_t.1} parent=1 // pred_check
      _
    $region15: #{ai_forward_t.1} parent=1 // pred_check_branch
      %21 = sbr.rel (0) target = $region17
    $region16: #{ai_forward_t.1} parent=1 // pred_region
      _
    $region17: #{ai_forward_t.1} parent=1 // pred_fallthru
      _
    // Predicated region
    $region18: #{ai_forward_t.1} parent=1 // pred_check
      _
    $region19: #{ai_forward_t.1} parent=1 // pred_check_branch
      %23 = sbr.rel (0) target = $region21
    $region20: #{ai_forward_t.1} parent=1 // pred_region
      _
    $region21: #{ai_forward_t.1} parent=1 // pred_fallthru
      _
    // Predicated region
    $region22: #{ai_forward_t.1} parent=1 // pred_check
      _
    $region23: #{ai_forward_t.1} parent=1 // pred_check_branch
      %25 = sbr.rel (0) target = $region25
    $region24: #{ai_forward_t.1} parent=1 // pred_region
      _
    $region25: #{ai_forward_t.1} parent=1 // pred_fallthru
      _
    // Predicated region
    $region26: #{ai_forward_t.1} parent=1 // pred_check
      _
    $region27: #{ai_forward_t.1} parent=1 // pred_check_branch
      %27 = sbr.rel (0) target = $region29
    $region28: #{ai_forward_t.1} parent=1 // pred_region
      _
    $region29: #{ai_forward_t.1} parent=1 // pred_fallthru
      _
    %v28 = vld [vmem:[%s0] sm:$0x3]
    %v29 = vld [vmem:[%s1] sm:$0xff]
    %v30 = vld [vmem:[%s1 + $0x8] sm:$0xff]
    %v31 = vld [vmem:[%s1 + $0x10] sm:$0xff]
    %v32 = vld [vmem:[%s1 + $0x18] sm:$0xff]
    %34 = vset.pattern.permute.xlu0 0
    %35 = vperm.xlu0 %34, %v29
    %v36 = vpop.permute.xlu0 %35
    %39 = vset.pattern.permute.xlu0 0
    %40 = vperm.xlu0 %39, %v30
    %v41 = vpop.permute.xlu0 %40
    %44 = vset.pattern.permute.xlu0 0
    %45 = vperm.xlu0 %44, %v31
    %v46 = vpop.permute.xlu0 %45
    %49 = vset.pattern.permute.xlu0 0
    %50 = vperm.xlu0 %49, %v32
    %v51 = vpop.permute.xlu0 %50
    %v53 = vlaneseq
    %v54 = vshrl.u32 %v53, 7
    %v55 = vsub.s32 0, %v54
    %v56 = vrot.slane %v28, %v55
    %v57 = vmul.f32 %v36, %v56
    %v58 = vmul.f32 %v41, %v56
    %v59 = vmul.f32 %v46, %v56
    %v60 = vmul.f32 %v51, %v56
    %61 = vset.pattern.permute.xlu0 1
    %62 = vperm.xlu0 %61, %v29
    %v63 = vpop.permute.xlu0 %62
    %65 = vset.pattern.permute.xlu0 1
    %66 = vperm.xlu0 %65, %v30
    %v67 = vpop.permute.xlu0 %66
    %69 = vset.pattern.permute.xlu0 1
    %70 = vperm.xlu0 %69, %v31
    %v71 = vpop.permute.xlu0 %70
    %73 = vset.pattern.permute.xlu0 1
    %74 = vperm.xlu0 %73, %v32
    %v75 = vpop.permute.xlu0 %74
    %v77 = vlaneseq
    %v78 = vshrl.u32 %v77, 7
    %v79 = vsub.s32 1, %v78
    %v80 = vrot.slane %v28, %v79
    %v81 = vmul.f32 %v63, %v80
    %v82 = vmul.f32 %v67, %v80
    %v83 = vmul.f32 %v71, %v80
    %v84 = vmul.f32 %v75, %v80
    %v85 = vadd.f32 %v57, %v81
    %v86 = vadd.f32 %v58, %v82
    %v87 = vadd.f32 %v59, %v83
    %v88 = vadd.f32 %v60, %v84
    %v89 = vld [vmem:[%s2] sm:$0xff]
    %v90 = vld [vmem:[%s2 + $0x8] sm:$0xff]
    %v91 = vld [vmem:[%s2 + $0x10] sm:$0xff]
    %v92 = vld [vmem:[%s2 + $0x18] sm:$0xff]
    %94 = vset.pattern.permute.xlu0 0
    %95 = vperm.xlu0 %94, %v89
    %v96 = vpop.permute.xlu0 %95
    %99 = vset.pattern.permute.xlu0 0
    %100 = vperm.xlu0 %99, %v90
    %v101 = vpop.permute.xlu0 %100
    %104 = vset.pattern.permute.xlu0 0
    %105 = vperm.xlu0 %104, %v91
    %v106 = vpop.permute.xlu0 %105
    %109 = vset.pattern.permute.xlu0 0
    %110 = vperm.xlu0 %109, %v92
    %v111 = vpop.permute.xlu0 %110
    %v113 = vadd.f32 %v85, %v96
    %v114 = vadd.f32 %v86, %v101
    %v115 = vadd.f32 %v87, %v106
    %v116 = vadd.f32 %v88, %v111
    %v117 = vmax.f32 %v113, 0.0
    %v118 = vmax.f32 %v114, 0.0
    %v119 = vmax.f32 %v115, 0.0
    %v120 = vmax.f32 %v116, 0.0
    %v121 = vld [vmem:[%s3] sm:$0xff]
    %v122 = vld [vmem:[%s3 + $0x8] sm:$0xff]
    %v123 = vld [vmem:[%s4] sm:$0xff]
    %v124 = vld [vmem:[%s4 + $0x8] sm:$0xff]
    %126 = vset.pattern.permute.xlu0 0
    %127 = vperm.xlu0 %126, %v123
    %v128 = vpop.permute.xlu0 %127
    %131 = vset.pattern.permute.xlu0 0
    %132 = vperm.xlu0 %131, %v124
    %v133 = vpop.permute.xlu0 %132
    %vm135 = vcmask 261120
    %v137 = vsel %vm135, %v121, 0
    %v140 = vsel %vm135, %v122, 0
    %142 = vmatprep.subr.mxu0 0.0
    %143 = vmatpush1.msra.mxu0 0.0
    %144 = vmatprep.subr.mxu0 0.0
    %145 = vmatpush1.msra.mxu0 0.0
    %146 = vmatprep.subr.mxu0 0.0
    %147 = vmatpush1.msra.mxu0 0.0
    %148 = vmatprep.subr.mxu0 0.0
    %149 = vmatpush1.msra.mxu0 0.0
    %150 = vmatprep.subr.mxu0 0.0
    %151 = vmatpush1.msra.mxu0 0.0
    %152 = vmatprep.subr.mxu0 0.0
    %153 = vmatpush1.msra.mxu0 0.0
    %154 = vmatprep.subr.mxu0 0.0
    %155 = vmatpush1.msra.mxu0 0.0
    %156 = vmatprep.subr.mxu0 0.0
    %157 = vmatpush1.msra.mxu0 0.0
    %158 = vmatprep.subr.mxu0 0.0
    %159 = vmatpush1.msra.mxu0 0.0
    %160 = vmatprep.subr.mxu0 0.0
    %161 = vmatpush1.msra.mxu0 0.0
    %162 = vmatprep.subr.mxu0 0.0
    %163 = vmatpush1.msra.mxu0 0.0
    %164 = vmatprep.subr.mxu0 0.0
    %165 = vmatpush1.msra.mxu0 0.0
    %166 = vmatprep.subr.mxu0 0.0
    %167 = vmatpush1.msra.mxu0 %v120
    %168 = vmatprep.subr.mxu0 0.0
    %169 = vmatpush1.msra.mxu0 %v119
    %170 = vmatprep.subr.mxu0 0.0
    %171 = vmatpush1.msra.mxu0 %v118
    %172 = vmatprep.subr.mxu0 0.0
    %173 = vmatpush1.msra.mxu0 %v117
    %174 = vmatprep.subr.mxu0 0.0
    %175 = vmatpush2.msra.mxu0 0.0
    %176 = vmatprep.subr.mxu0 0.0
    %177 = vmatpush2.msra.mxu0 0.0
    %178 = vmatprep.subr.mxu0 0.0
    %179 = vmatpush2.msra.mxu0 0.0
    %180 = vmatprep.subr.mxu0 0.0
    %181 = vmatpush2.msra.mxu0 0.0
    %182 = vmatprep.subr.mxu0 0.0
    %183 = vmatpush2.msra.mxu0 0.0
    %184 = vmatprep.subr.mxu0 0.0
    %185 = vmatpush2.msra.mxu0 0.0
    %186 = vmatprep.subr.mxu0 0.0
    %187 = vmatpush2.msra.mxu0 0.0
    %188 = vmatprep.subr.mxu0 0.0
    %189 = vmatpush2.msra.mxu0 0.0
    %190 = vmatprep.subr.mxu0 0.0
    %191 = vmatpush2.msra.mxu0 0.0
    %192 = vmatprep.subr.mxu0 0.0
    %193 = vmatpush2.msra.mxu0 0.0
    %194 = vmatprep.subr.mxu0 0.0
    %195 = vmatpush2.msra.mxu0 0.0
    %196 = vmatprep.subr.mxu0 0.0
    %197 = vmatpush2.msra.mxu0 0.0
    %198 = vmatprep.subr.mxu0 0.0
    %199 = vmatpush2.msra.mxu0 0.0
    %200 = vmatprep.subr.mxu0 0.0
    %201 = vmatpush2.msra.mxu0 0.0
    %202 = vmatprep.subr.mxu0 0.0
    %203 = vmatpush2.msra.mxu0 0.0
    %204 = vmatprep.subr.mxu0 0.0
    %205 = vmatpush2.msra.mxu0 0.0
    %206 = vmatprep.mubr.f32.mxu0 0.0
    %207 = vmatmul.mubr.f32.gmra.mxu0 %v137
    %v208 = vpop.f32.mrf.mxu0
    %v209 = vadd.f32 %v128, %v208
    %v210 = vpop.f32.mrf.mxu0
    %211 = vmatprep.mubr.f32.mxu0 0.0
    %212 = vmatmul.mubr.f32.gmra.mxu0 %v140
    %v213 = vpop.f32.mrf.mxu0
    %v214 = vadd.f32 %v133, %v213
    %v215 = vpop.f32.mrf.mxu0
    %216 = vdwg.mxu0
    %v217 = vmax.f32 %v209, 0.0
    %v218 = vmax.f32 %v214, 0.0
    %v219 = vld [vmem:[%s5] sm:$0xff]
    %v220 = vld [vmem:[%s5 + $0x8] sm:$0xff]
    %222 = vset.pattern.permute.xlu0 0
    %223 = vperm.xlu0 %222, %v219
    %v224 = vpop.permute.xlu0 %223
    %227 = vset.pattern.permute.xlu0 0
    %228 = vperm.xlu0 %227, %v220
    %v229 = vpop.permute.xlu0 %228
    %v231 = vmul.f32 %v224, %v217
    %v232 = vmul.f32 %v229, %v218
    %v233 = vadd.f32 %v231, %v232
    %v234 = vrot.slane %v233, 4
    %v235 = vadd.f32 %v233, %v234
    %v236 = vrot.slane %v235, 2
    %v237 = vadd.f32 %v235, %v236
    %v238 = vrot.slane %v237, 1
    %v239 = vadd.f32 %v237, %v238
    %s240 = sld [smem:[#allocation2]]
    %v241 = vstv %s240
    %v242 = vadd.f32 %v239, %v241
    %243 = vst [vmem:[#allocation3] sm:$0x1] %v242
    // Predicated region
    $region30: #{ai_forward_t.1} parent=1 // pred_check
      _
    $region31: #{ai_forward_t.1} parent=1 // pred_check_branch
      %245 = sbr.rel (0) target = $region33
    $region32: #{ai_forward_t.1} parent=1 // pred_region
      %s247 = ssub.s32 16, 16
      %248 = vsyncadd [#allocation4], %s247
      %s250 = sshll.u32 [#allocation3], 4
      %s251 = int_to_ptr.vmem [resolvable:$true] %s250
      %253 = dma.vmem_to_hbm [thread:$0]  %s251, 16, %s7, [#allocation4]
    $region33: #{ai_forward_t.1} parent=1 // pred_fallthru
      _
    // Predicated region
    $region34: #{ai_forward_t.1} parent=1 // pred_check
      _
    $region35: #{ai_forward_t.1} parent=1 // pred_check_branch
      %255 = sbr.rel (0) target = $region37
    $region36: #{ai_forward_t.1} parent=1 // pred_region
      %256 = dma.done [#allocation4], 16
    $region37: #{ai_forward_t.1} parent=1 // pred_fallthru
      _
    %257 = vsyncpa [#allocation4], 1

</llo_original>
